<compile_context>
chip_gen: v6e
topology: v6e:2x2x1
jax: 0.10.0
libtpu: 0.0.40
codegen_flags: <defaults>
</compile_context>

<pallas_src>
import numpy as np
import jax
import jax.numpy as jnp
from jax.experimental import pallas as pl
from jax.experimental.pallas import tpu as pltpu


# ----------------------------------------------------------------------------
# Gate construction (plain numpy "parameter setup" glue, deterministic).
# ----------------------------------------------------------------------------
def _sym_gellmann(dim, j, k):
    # symmetric generator S_{jk} = |j><k| + |k><j|   (1-based j<k)
    g = np.zeros((dim, dim), dtype=np.complex128)
    g[j - 1, k - 1] = 1.0
    g[k - 1, j - 1] = 1.0
    return g


def _antisym_gellmann(dim, j, k):
    # antisymmetric generator A_{jk} = -i|j><k| + i|k><j|
    g = np.zeros((dim, dim), dtype=np.complex128)
    g[j - 1, k - 1] = -1.0j
    g[k - 1, j - 1] = 1.0j
    return g


def _diag_gellmann(dim, j):
    # diagonal generator D_j = sqrt(2/(j(j+1))) (sum_{m<j}|m><m| - j|j><j|)
    g = np.zeros((dim, dim), dtype=np.complex128)
    coef = np.sqrt(2.0 / (j * (j + 1)))
    for m in range(j):
        g[m, m] = coef
    g[j, j] = -j * coef
    return g


def _expm_iherm(theta_half, gen):
    # exp(-i * theta/2 * G) for Hermitian G, via eigendecomposition.
    w, v = np.linalg.eigh(gen)
    return (v * np.exp(-1.0j * theta_half * w)) @ v.conj().T


def _embed_single(u, index, n, dim):
    # kron(I_{dim^index}, u, I_{dim^(n-index-1)})  -- Rot acts on one qudit only
    left = np.eye(dim ** index, dtype=np.complex128)
    right = np.eye(dim ** (n - index - 1), dtype=np.complex128)
    return np.kron(np.kron(left, u), right)


def _cnot_full(control, target, n, dim):
    # generalized CNOT (pure permutation): |..c..t..> -> |..c..(t+c) mod dim..>
    D = dim ** n
    U = np.zeros((D, D), dtype=np.complex128)
    for idx in range(D):
        digits = []
        rem = idx
        for q in range(n):
            digits.append(rem // dim ** (n - q - 1))
            rem = rem % dim ** (n - q - 1)
        digits[target] = (digits[target] + digits[control]) % dim
        new_idx = 0
        for q in range(n):
            new_idx = new_idx * dim + digits[q]
        U[new_idx, idx] = 1.0
    return U


def build_circuit_layers(n, l, dim, seed=0):
    """Replicates Model4.__init__ gate structure with a deterministic RNG.

    Per layer: for each qudit j, two Rot gates with randomly chosen Gell-Mann
    generator; then a generalized CNOT for every ordered pair (j, k), j != k.
    Returns a list (length l) of lists of dense D x D complex unitaries, in
    application order.
    """
    rng = np.random.RandomState(seed)
    layers = []
    for _ in range(l):
        layer = []
        for j in range(n):
            for _ in range(2):  # two Rot gates per qudit per layer
                mdx = int(rng.choice(3))
                if mdx == 2:
                    d1 = int(rng.choice(dim - 1)) + 1
                    gen = _diag_gellmann(dim, d1)
                else:
                    d2 = int(rng.choice(dim - 1)) + 2
                    d1 = int(rng.choice(d2 - 1)) + 1
                    gen = (_sym_gellmann(dim, d1, d2) if mdx == 0
                           else _antisym_gellmann(dim, d1, d2))
                theta = rng.uniform(0.0, 2.0 * np.pi)  # deterministic "learned" angle
                u = _expm_iherm(0.5 * theta, gen)
                layer.append(_embed_single(u, j, n, dim))
        for j in range(n):
            for k in range(n):
                if j != k:
                    layer.append(_cnot_full(j, k, n, dim))
        layers.append(layer)
    return layers


def fuse_layer(gates, D):
    """Product of a layer's gates (application order) in exact complex128."""
    U = np.eye(D, dtype=np.complex128)
    for g in gates:
        U = g @ U
    return U


def realify_row(U):
    """Row-vector realification of psi_row <- psi_row @ U^T.

    With s = [pr | pi] (1, 2D) and W = [[A, B], [-B, A]], A = Re(U^T),
    B = Im(U^T), the complex matvec becomes the single real matmul s @ W.
    """
    T = U.T
    A = T.real.astype(np.float32)
    B = T.imag.astype(np.float32)
    return np.block([[A, B], [-B, A]]).astype(np.float32)


# ----------------------------------------------------------------------------
# Pallas kernel: single grid step, one lane-dense matmul per fused layer,
# then |psi|^2 readout (the `prob` op over all qudits).
# ----------------------------------------------------------------------------
def circuit_kernel(w_ref, out_ref):
    L = w_ref.shape[0]
    D2 = w_ref.shape[1]
    D = D2 // 2

    # state |0...0> in realified row layout [pr | pi]: pr[0] = 1, rest 0
    psi0 = jnp.where(
        jax.lax.broadcasted_iota(jnp.int32, (1, D2), 1) == 0, 1.0, 0.0
    ).astype(jnp.float32)

    def body(i, psi):
        # psi_row <- psi_row @ W_layer  (one MXU push: (1,2D)@(2D,2D))
        return jnp.dot(psi, w_ref[i], preferred_element_type=jnp.float32)

    psi = jax.lax.fori_loop(0, L, body, psi0, unroll=True)

    pr = psi[:, :D]
    pi = psi[:, D:]
    out_ref[...] = pr * pr + pi * pi


def run_circuit(w_layers):
    L, D2, _ = w_layers.shape
    D = D2 // 2
    return pl.pallas_call(
        circuit_kernel,
        out_shape=jax.ShapeDtypeStruct((1, D), jnp.float32),
        grid=(1,),
        in_specs=[pl.BlockSpec((L, D2, D2), lambda i: (0, 0, 0))],
        out_specs=pl.BlockSpec((1, D), lambda i: (0, 0)),
        compiler_params=pltpu.CompilerParams(
            dimension_semantics=("arbitrary",),
        ),
    )(w_layers)


# ----------------------------------------------------------------------------
if __name__ == "__main__":
    # small shapes: n=3 qudits of dimension dim=4, l=2 layers  ->  D = 64
    n, l, dim = 3, 2, 4
    D = dim ** n

    layers = build_circuit_layers(n, l, dim, seed=0)

    # host-side per-layer fusion (exact complex128) + realification to
    # (L, 2D, 2D) float32 row-vector form
    w_layers = np.stack([realify_row(fuse_layer(g, D)) for g in layers], axis=0)
    w_layers = jnp.asarray(w_layers, dtype=jnp.float32)

    # (jax.random key only used to satisfy the "deterministic inputs"
    #  convention; the circuit itself has no tensor input — it starts
    #  from |0...0>)
    _ = jax.random.PRNGKey(0)

    probs = run_circuit(w_layers)
    probs = jax.block_until_ready(probs)

    # reference: plain numpy complex simulation, gate by gate
    psi = np.zeros((D,), dtype=np.complex128)
    psi[0] = 1.0
    for layer in layers:
        for g in layer:
            psi = g @ psi
    probs_ref = np.abs(psi) ** 2

    np.testing.assert_allclose(np.asarray(probs)[0], probs_ref, atol=1e-4)
    assert abs(float(jnp.sum(probs)) - 1.0) < 1e-3

    print("KERNEL_OK")
</pallas_src>

<mosaic_0001>
module attributes {stable_mosaic.version = 11 : i64} {
  func.func @circuit_kernel(%arg0: i32, %arg1: memref<2x128x128xf32, #tpu.memory_space<vmem>>, %arg2: memref<1x64xf32, #tpu.memory_space<vmem>>) attributes {dimension_semantics = [#tpu.dimension_semantics<arbitrary>], iteration_bounds = array<i64: 1>, scalar_prefetch = 0 : i64, scratch_operands = 0 : i64, tpu.core_type = #tpu.core_type<tc>, window_params = [{pipeline_mode = #tpu.pipeline_mode<synchronous>, transform_indices = @transform_0, window_bounds = array<i64: 2, 128, 128>}, {pipeline_mode = #tpu.pipeline_mode<synchronous>, transform_indices = @transform_1, window_bounds = array<i64: 1, 64>}]} {
    %0 = tpu.iota {dimensions = array<i32: 1>} : vector<1x128xi32>
    %c0_i32 = arith.constant 0 : i32
    %1 = vector.broadcast %c0_i32 : i32 to vector<1x128xi32>
    %2 = arith.cmpi eq, %0, %1 : vector<1x128xi32>
    %cst = arith.constant 1.000000e+00 : f32
    %cst_0 = arith.constant 0.000000e+00 : f32
    %3 = vector.broadcast %cst : f32 to vector<1x128xf32>
    %4 = vector.broadcast %cst_0 : f32 to vector<1x128xf32>
    %5 = arith.select %2, %3, %4 : vector<1x128xi1>, vector<1x128xf32>
    %c0_i32_1 = arith.constant 0 : i32
    %6 = arith.index_cast %c0_i32_1 : i32 to index
    %c0 = arith.constant 0 : index
    %c0_2 = arith.constant 0 : index
    %7 = vector.load %arg1[%6, %c0, %c0_2] : memref<2x128x128xf32, #tpu.memory_space<vmem>>, vector<1x128x128xf32>
    %8 = vector.shape_cast %7 : vector<1x128x128xf32> to vector<128x128xf32>
    %cst_3 = arith.constant dense<0.000000e+00> : vector<1x128xf32>
    %9 = tpu.matmul %5, %8, %cst_3 {dimension_numbers = #tpu.dot_dimension_numbers<[1], [0], [0], [1], [0, 0, 1, 1], [], []>} : vector<1x128xf32>, vector<128x128xf32>, vector<1x128xf32> -> vector<1x128xf32>
    %c1_i32 = arith.constant 1 : i32
    %10 = arith.index_cast %c1_i32 : i32 to index
    %c0_4 = arith.constant 0 : index
    %c0_5 = arith.constant 0 : index
    %11 = vector.load %arg1[%10, %c0_4, %c0_5] : memref<2x128x128xf32, #tpu.memory_space<vmem>>, vector<1x128x128xf32>
    %12 = vector.shape_cast %11 : vector<1x128x128xf32> to vector<128x128xf32>
    %cst_6 = arith.constant dense<0.000000e+00> : vector<1x128xf32>
    %13 = tpu.matmul %9, %12, %cst_6 {dimension_numbers = #tpu.dot_dimension_numbers<[1], [0], [0], [1], [0, 0, 1, 1], [], []>} : vector<1x128xf32>, vector<128x128xf32>, vector<1x128xf32> -> vector<1x128xf32>
    %c2_i32 = arith.constant 2 : i32
    %14 = vector.extract_strided_slice %13 {offsets = [0, 0], sizes = [1, 64], strides = [1, 1]} : vector<1x128xf32> to vector<1x64xf32>
    %15 = vector.extract_strided_slice %13 {offsets = [0, 64], sizes = [1, 64], strides = [1, 1]} : vector<1x128xf32> to vector<1x64xf32>
    %16 = arith.mulf %14, %14 : vector<1x64xf32>
    %17 = arith.mulf %15, %15 : vector<1x64xf32>
    %18 = arith.addf %16, %17 : vector<1x64xf32>
    %c0_7 = arith.constant 0 : index
    %c0_8 = arith.constant 0 : index
    %19 = vector.load %arg2[%c0_7, %c0_8] : memref<1x64xf32, #tpu.memory_space<vmem>>, vector<1x64xf32>
    tpu.vector_store %arg2[%c0_7, %c0_8], %18 {strides = array<i32>} : memref<1x64xf32, #tpu.memory_space<vmem>>, vector<1x64xf32>,
    return
  }
  func.func @transform_0(%arg0: i32) -> (i32, i32, i32) {
    %c0_i32 = arith.constant 0 : i32
    %c0_i32_0 = arith.constant 0 : i32
    %c0_i32_1 = arith.constant 0 : i32
    %c0_i32_2 = arith.constant 0 : i32
    return %c0_i32, %c0_i32_0, %c0_i32_1 : i32, i32, i32
  }
  func.func @transform_1(%arg0: i32) -> (i32, i32) {
    %c0_i32 = arith.constant 0 : i32
    %c0_i32_0 = arith.constant 0 : i32
    %c0_i32_1 = arith.constant 0 : i32
    return %c0_i32, %c0_i32_0 : i32, i32
  }
}

</mosaic_0001>

<llo_original>
// kernel: tpu_custom_call.1
$region0: #{tpu_custom_call.1}
  #allocation0 [shape = 'u32[]', space=smem, size = 0x4, offset = 0x4, fixed_abs, tag = 'smem constant byte address 0x4 - core index']
  #allocation1 [shape = 'u32[144,128]{1,0:T(1,128)}', space=vmem, size = 0x12000, scoped, tag = 'internal scratch']
  %s0 = inlined_call_operand.hbm [shape: f32[2,128,128], index: 0, kind: input, shape index: {}]
  %s1 = inlined_call_operand.hbm [shape: f32[1,64], index: 1, kind: output, shape index: {}]
  %s2 = sld [smem:[#allocation0]]
  $region18: #{tpu_custom_call.1} parent=0
    _
  %s4 = ssub.s32 1, %s2
  %s5 = scalar_select 0, %s4, %s2
  $region1: #{tpu_custom_call.1} parent=0
    #allocation2 [shape = 'u8[131072]{0}', space=vmem, size = 0x20000, scoped, tag = 'input window, operand 0, single buffered']
    #allocation3 [shape = 's32[1]{0}', space=sflag, size = 0x4, scoped, tag = 'scoped memory for tpu_custom_call.1']
    #allocation4 [shape = 's32[1]{0}', space=sflag, size = 0x4, scoped, tag = 'scoped memory for tpu_custom_call.1']
    #allocation5 [shape = 'u8[512]{0}', space=vmem, size = 0x400, scoped, tag = 'output window, operand 0, single buffered']
    %6 = vsyncpa [#allocation3], 0
    %7 = vsyncpa [#allocation4], 0
    // Predicated region
    $region2: #{tpu_custom_call.1} parent=1 // pred_check
      _
    $region3: #{tpu_custom_call.1} parent=1 // pred_check_branch
      %9 = sbr.rel (0) target = $region5
    $region4: #{tpu_custom_call.1} parent=1 // pred_region
      %s11 = ssub.s32 4096, 4096
      %12 = vsyncadd [#allocation3], %s11
      %s13 = sshll.u32 [#allocation2], 4
      %s14 = int_to_ptr.vmem [resolvable:$true] %s13
      %19 = dma.hbm_to_vmem [thread:$0]  %s0, 4096, %s14, [#allocation3], 128, 128, 8
    $region5: #{tpu_custom_call.1} parent=1 // pred_fallthru
      _
    // Predicated region
    $region6: #{tpu_custom_call.1} parent=1 // pred_check
      _
    $region7: #{tpu_custom_call.1} parent=1 // pred_check_branch
      %21 = sbr.rel (0) target = $region9
    $region8: #{tpu_custom_call.1} parent=1 // pred_region
      %22 = dma.done [#allocation3], 4096
    $region9: #{tpu_custom_call.1} parent=1 // pred_fallthru
      _
    %v23 = vlaneseq
    %v24 = vand.u32 %v23, 127
    %vm25 = vcmp.eq.s32.totalorder %v24, 0
    %v26 = vsel %vm25, 1.0, 0.0
    %v27 = vld [vmem:[#allocation2] sm:$0xff]
    %v28 = vld [vmem:[#allocation2 + $0x8] sm:$0xff]
    %v29 = vld [vmem:[#allocation2 + $0x10] sm:$0xff]
    %v30 = vld [vmem:[#allocation2 + $0x18] sm:$0xff]
    %v31 = vld [vmem:[#allocation2 + $0x20] sm:$0xff]
    %v32 = vld [vmem:[#allocation2 + $0x28] sm:$0xff]
    %v33 = vld [vmem:[#allocation2 + $0x30] sm:$0xff]
    %v34 = vld [vmem:[#allocation2 + $0x38] sm:$0xff]
    %v35 = vld [vmem:[#allocation2 + $0x40] sm:$0xff]
    %v36 = vld [vmem:[#allocation2 + $0x48] sm:$0xff]
    %v37 = vld [vmem:[#allocation2 + $0x50] sm:$0xff]
    %v38 = vld [vmem:[#allocation2 + $0x58] sm:$0xff]
    %v39 = vld [vmem:[#allocation2 + $0x60] sm:$0xff]
    %v40 = vld [vmem:[#allocation2 + $0x68] sm:$0xff]
    %v41 = vld [vmem:[#allocation2 + $0x70] sm:$0xff]
    %v42 = vld [vmem:[#allocation2 + $0x78] sm:$0xff]
    %43 = vmatprep.subr.mxu0 0.0
    %44 = vmatpush1.msra.mxu0 %v42
    %45 = vmatprep.subr.mxu0 0.0
    %46 = vmatpush1.msra.mxu0 %v41
    %47 = vmatprep.subr.mxu0 0.0
    %48 = vmatpush1.msra.mxu0 %v40
    %49 = vmatprep.subr.mxu0 0.0
    %50 = vmatpush1.msra.mxu0 %v39
    %51 = vmatprep.subr.mxu0 0.0
    %52 = vmatpush1.msra.mxu0 %v38
    %53 = vmatprep.subr.mxu0 0.0
    %54 = vmatpush1.msra.mxu0 %v37
    %55 = vmatprep.subr.mxu0 0.0
    %56 = vmatpush1.msra.mxu0 %v36
    %57 = vmatprep.subr.mxu0 0.0
    %58 = vmatpush1.msra.mxu0 %v35
    %59 = vmatprep.subr.mxu0 0.0
    %60 = vmatpush1.msra.mxu0 %v34
    %61 = vmatprep.subr.mxu0 0.0
    %62 = vmatpush1.msra.mxu0 %v33
    %63 = vmatprep.subr.mxu0 0.0
    %64 = vmatpush1.msra.mxu0 %v32
    %65 = vmatprep.subr.mxu0 0.0
    %66 = vmatpush1.msra.mxu0 %v31
    %67 = vmatprep.subr.mxu0 0.0
    %68 = vmatpush1.msra.mxu0 %v30
    %69 = vmatprep.subr.mxu0 0.0
    %70 = vmatpush1.msra.mxu0 %v29
    %71 = vmatprep.subr.mxu0 0.0
    %72 = vmatpush1.msra.mxu0 %v28
    %73 = vmatprep.subr.mxu0 0.0
    %74 = vmatpush1.msra.mxu0 %v27
    %75 = vmatprep.subr.mxu0 0.0
    %76 = vmatpush2.msra.mxu0 0.0
    %77 = vmatprep.subr.mxu0 0.0
    %78 = vmatpush2.msra.mxu0 0.0
    %79 = vmatprep.subr.mxu0 0.0
    %80 = vmatpush2.msra.mxu0 0.0
    %81 = vmatprep.subr.mxu0 0.0
    %82 = vmatpush2.msra.mxu0 0.0
    %83 = vmatprep.subr.mxu0 0.0
    %84 = vmatpush2.msra.mxu0 0.0
    %85 = vmatprep.subr.mxu0 0.0
    %86 = vmatpush2.msra.mxu0 0.0
    %87 = vmatprep.subr.mxu0 0.0
    %88 = vmatpush2.msra.mxu0 0.0
    %89 = vmatprep.subr.mxu0 0.0
    %90 = vmatpush2.msra.mxu0 0.0
    %91 = vmatprep.subr.mxu0 0.0
    %92 = vmatpush2.msra.mxu0 0.0
    %93 = vmatprep.subr.mxu0 0.0
    %94 = vmatpush2.msra.mxu0 0.0
    %95 = vmatprep.subr.mxu0 0.0
    %96 = vmatpush2.msra.mxu0 0.0
    %97 = vmatprep.subr.mxu0 0.0
    %98 = vmatpush2.msra.mxu0 0.0
    %99 = vmatprep.subr.mxu0 0.0
    %100 = vmatpush2.msra.mxu0 0.0
    %101 = vmatprep.subr.mxu0 0.0
    %102 = vmatpush2.msra.mxu0 0.0
    %103 = vmatprep.subr.mxu0 0.0
    %104 = vmatpush2.msra.mxu0 0.0
    %105 = vmatprep.subr.mxu0 0.0
    %106 = vmatpush2.msra.mxu0 0.0
    %107 = vmatprep.mubr.f32.mxu0 0.0
    %108 = vmatmul.mubr.f32.gmra.mxu0 %v26
    %v109 = vpop.f32.mrf.mxu0
    %v110 = vadd.f32 0.0, %v109
    %v111 = vpop.f32.mrf.mxu0
    %112 = vdwg.mxu0
    %s113 = scalar_lea.vmem [#allocation2], 128
    %v114 = vld [vmem:[%s113] sm:$0xff]
    %v115 = vld [vmem:[%s113 + $0x8] sm:$0xff]
    %v116 = vld [vmem:[%s113 + $0x10] sm:$0xff]
    %v117 = vld [vmem:[%s113 + $0x18] sm:$0xff]
    %v118 = vld [vmem:[%s113 + $0x20] sm:$0xff]
    %v119 = vld [vmem:[%s113 + $0x28] sm:$0xff]
    %v120 = vld [vmem:[%s113 + $0x30] sm:$0xff]
    %v121 = vld [vmem:[%s113 + $0x38] sm:$0xff]
    %v122 = vld [vmem:[%s113 + $0x40] sm:$0xff]
    %v123 = vld [vmem:[%s113 + $0x48] sm:$0xff]
    %v124 = vld [vmem:[%s113 + $0x50] sm:$0xff]
    %v125 = vld [vmem:[%s113 + $0x58] sm:$0xff]
    %v126 = vld [vmem:[%s113 + $0x60] sm:$0xff]
    %v127 = vld [vmem:[%s113 + $0x68] sm:$0xff]
    %v128 = vld [vmem:[%s113 + $0x70] sm:$0xff]
    %v129 = vld [vmem:[%s113 + $0x78] sm:$0xff]
    %130 = vmatprep.subr.mxu0 0.0
    %131 = vmatpush1.msra.mxu0 %v129
    %132 = vmatprep.subr.mxu0 0.0
    %133 = vmatpush1.msra.mxu0 %v128
    %134 = vmatprep.subr.mxu0 0.0
    %135 = vmatpush1.msra.mxu0 %v127
    %136 = vmatprep.subr.mxu0 0.0
    %137 = vmatpush1.msra.mxu0 %v126
    %138 = vmatprep.subr.mxu0 0.0
    %139 = vmatpush1.msra.mxu0 %v125
    %140 = vmatprep.subr.mxu0 0.0
    %141 = vmatpush1.msra.mxu0 %v124
    %142 = vmatprep.subr.mxu0 0.0
    %143 = vmatpush1.msra.mxu0 %v123
    %144 = vmatprep.subr.mxu0 0.0
    %145 = vmatpush1.msra.mxu0 %v122
    %146 = vmatprep.subr.mxu0 0.0
    %147 = vmatpush1.msra.mxu0 %v121
    %148 = vmatprep.subr.mxu0 0.0
    %149 = vmatpush1.msra.mxu0 %v120
    %150 = vmatprep.subr.mxu0 0.0
    %151 = vmatpush1.msra.mxu0 %v119
    %152 = vmatprep.subr.mxu0 0.0
    %153 = vmatpush1.msra.mxu0 %v118
    %154 = vmatprep.subr.mxu0 0.0
    %155 = vmatpush1.msra.mxu0 %v117
    %156 = vmatprep.subr.mxu0 0.0
    %157 = vmatpush1.msra.mxu0 %v116
    %158 = vmatprep.subr.mxu0 0.0
    %159 = vmatpush1.msra.mxu0 %v115
    %160 = vmatprep.subr.mxu0 0.0
    %161 = vmatpush1.msra.mxu0 %v114
    %162 = vmatprep.subr.mxu0 0.0
    %163 = vmatpush2.msra.mxu0 0.0
    %164 = vmatprep.subr.mxu0 0.0
    %165 = vmatpush2.msra.mxu0 0.0
    %166 = vmatprep.subr.mxu0 0.0
    %167 = vmatpush2.msra.mxu0 0.0
    %168 = vmatprep.subr.mxu0 0.0
    %169 = vmatpush2.msra.mxu0 0.0
    %170 = vmatprep.subr.mxu0 0.0
    %171 = vmatpush2.msra.mxu0 0.0
    %172 = vmatprep.subr.mxu0 0.0
    %173 = vmatpush2.msra.mxu0 0.0
    %174 = vmatprep.subr.mxu0 0.0
    %175 = vmatpush2.msra.mxu0 0.0
    %176 = vmatprep.subr.mxu0 0.0
    %177 = vmatpush2.msra.mxu0 0.0
    %178 = vmatprep.subr.mxu0 0.0
    %179 = vmatpush2.msra.mxu0 0.0
    %180 = vmatprep.subr.mxu0 0.0
    %181 = vmatpush2.msra.mxu0 0.0
    %182 = vmatprep.subr.mxu0 0.0
    %183 = vmatpush2.msra.mxu0 0.0
    %184 = vmatprep.subr.mxu0 0.0
    %185 = vmatpush2.msra.mxu0 0.0
    %186 = vmatprep.subr.mxu0 0.0
    %187 = vmatpush2.msra.mxu0 0.0
    %188 = vmatprep.subr.mxu0 0.0
    %189 = vmatpush2.msra.mxu0 0.0
    %190 = vmatprep.subr.mxu0 0.0
    %191 = vmatpush2.msra.mxu0 0.0
    %192 = vmatprep.subr.mxu0 0.0
    %193 = vmatpush2.msra.mxu0 0.0
    %194 = vmatprep.mubr.f32.mxu0 0.0
    %195 = vmatmul.mubr.f32.gmra.mxu0 %v110
    %v196 = vpop.f32.mrf.mxu0
    %v197 = vadd.f32 0.0, %v196
    %v198 = vpop.f32.mrf.mxu0
    %199 = vdwg.mxu0
    %v200 = vmul.f32 %v197, %v197
    %202 = vrot.lane.b32.xlu0 %v200, 64
    %v203 = vpop.permute.xlu0 %202
    %v205 = vadd.f32 %v200, %v203
    %vm206 = vcmask 516096
    %207 = vst.msk [vmem:[#allocation5] sm:$0x1] %vm206, %v205
    // Predicated region
    $region10: #{tpu_custom_call.1} parent=1 // pred_check
      _
    $region11: #{tpu_custom_call.1} parent=1 // pred_check_branch
      %209 = sbr.rel (0) target = $region13
    $region12: #{tpu_custom_call.1} parent=1 // pred_region
      %s211 = ssub.s32 16, 16
      %212 = vsyncadd [#allocation4], %s211
      %s214 = sshll.u32 [#allocation5], 4
      %s215 = int_to_ptr.vmem [resolvable:$true] %s214
      %217 = dma.vmem_to_hbm [thread:$0]  %s215, 16, %s1, [#allocation4]
    $region13: #{tpu_custom_call.1} parent=1 // pred_fallthru
      _
    // Predicated region
    $region14: #{tpu_custom_call.1} parent=1 // pred_check
      _
    $region15: #{tpu_custom_call.1} parent=1 // pred_check_branch
      %219 = sbr.rel (0) target = $region17
    $region16: #{tpu_custom_call.1} parent=1 // pred_region
      %220 = dma.done [#allocation4], 16
    $region17: #{tpu_custom_call.1} parent=1 // pred_fallthru
      _
    %221 = vsyncpa [#allocation3], 1
    %222 = vsyncpa [#allocation4], 1

</llo_original>
